<compile_context>
chip_gen: v6e
topology: v6e:2x2x1
jax: 0.10.0
libtpu: 0.0.40
codegen_flags: <defaults>
</compile_context>

<pallas_src>
import jax
import jax.numpy as jnp
from jax.experimental import pallas as pl
from jax.experimental.pallas import tpu as pltpu


_LANES = 128
_SUBLANES = 8
_MIN_COLS = _SUBLANES * _LANES       # 1024 batch columns = one (8, 128) tile
_MAX_COLS = 128 * 1024               # 128K cols/step -> ~4 MiB HBM traffic/step,
                                     # ~8 MiB double-buffered VMEM (v7x-safe)


def _policy_kernel(w_ref, b_ref, in_ref, out_ref):
    """Fused i2h + i2o + 2-class log-softmax on dense (S, 128) tiles.

    w_ref:   (4, 4)      SMEM  fused weight W[k, j]; k = input feature
                               (x0, x1, h0, h1), j = output column
                               (hid0, hid1, logit0, logit1)
    b_ref:   (4,)        SMEM  fused bias (bh0, bh1, bo0, bo1)
    in_ref:  (4, S, 128) VMEM  rows x0, x1, h0, h1; batch dense on sublanes+lanes
    out_ref: (4, S, 128) VMEM  rows hid0, hid1, logp0, logp1
    """
    x0 = in_ref[0]                    # (S, 128) dense tile
    x1 = in_ref[1]
    h0 = in_ref[2]
    h1 = in_ref[3]

    # Hoist all SMEM scalar reads once; they broadcast across the dense tiles.
    w = [[w_ref[k, j] for j in range(4)] for k in range(4)]
    bias = [b_ref[j] for j in range(4)]

    # K=4 contraction as unrolled scalar*vector multiply-adds on the VPU.
    def fused_col(j):
        return (x0 * w[0][j] + bias[j]) + x1 * w[1][j] + h0 * w[2][j] + h1 * w[3][j]

    hid0 = fused_col(0)
    hid1 = fused_col(1)
    lg0 = fused_col(2)
    lg1 = fused_col(3)

    # Numerically stable 2-class log-softmax (softplus form: 1 exp + 1 log).
    m = jnp.maximum(lg0, lg1)
    lse = m + jnp.log(1.0 + jnp.exp(-jnp.abs(lg0 - lg1)))

    # Dense, full-tile (unmasked) stores.
    out_ref[0] = hid0
    out_ref[1] = hid1
    out_ref[2] = lg0 - lse
    out_ref[3] = lg1 - lse


def _choose_tiling(batch):
    """Pick (tile_cols, padded_cols) for the batch axis.

    Batch columns map densely onto (sublane, lane) = (tile_cols // 128, 128).
    Prefer >= 2 grid steps once there is enough work (v7x megacore sharding)
    while keeping each step's HBM traffic large and the per-step footprint
    well under v7x's 64 MiB VMEM.
    """
    units = pl.cdiv(batch, _MIN_COLS)            # number of 1024-column units
    if units <= 1:
        return _MIN_COLS, _MIN_COLS
    n_steps = max(2, pl.cdiv(units * _MIN_COLS, _MAX_COLS))
    tile_cols = pl.cdiv(units, n_steps) * _MIN_COLS
    padded = pl.cdiv(units * _MIN_COLS, tile_cols) * tile_cols
    return tile_cols, padded


def _policy_call(in_slab, w, b, tile_sublanes):
    """Run the kernel on a feature-major slab.

    in_slab: (4, S_total, 128) float32, rows = (x0, x1, h0, h1).
    Returns (4, S_total, 128) float32, rows = (hid0, hid1, logp0, logp1).
    S_total must be a multiple of tile_sublanes (itself a multiple of 8).
    """
    _, s_total, lanes = in_slab.shape
    grid = (s_total // tile_sublanes,)
    return pl.pallas_call(
        _policy_kernel,
        out_shape=jax.ShapeDtypeStruct((4, s_total, lanes), jnp.float32),
        grid_spec=pltpu.PrefetchScalarGridSpec(
            num_scalar_prefetch=0,
            grid=grid,
            in_specs=[
                pl.BlockSpec(memory_space=pltpu.MemorySpace.SMEM),    # W (4, 4)
                pl.BlockSpec(memory_space=pltpu.MemorySpace.SMEM),    # b (4,)
                pl.BlockSpec((4, tile_sublanes, lanes), lambda i: (0, i, 0)),
            ],
            out_specs=pl.BlockSpec((4, tile_sublanes, lanes), lambda i: (0, i, 0)),
        ),
        compiler_params=pltpu.CompilerParams(
            dimension_semantics=("parallel",)),
    )(w, b, in_slab)


def policy_forward(x, hidden, params):
    """x: (B, 2), hidden: (B, 2), params: (W (4,4), b (4,)).

    Returns (log_softmax_output (B, 2), new_hidden (B, 2)) — matches the
    PyTorch module's forward.
    """
    w, b = params
    B = x.shape[0]

    tile_cols, padded_cols = _choose_tiling(B)
    tile_sublanes = tile_cols // _LANES
    s_total = padded_cols // _LANES

    # Build the fused feature-major slab once: one concat + one pad + reshape.
    xh = jnp.concatenate([x, hidden], axis=1).astype(jnp.float32).T   # (4, B)
    xh = jnp.pad(xh, ((0, 0), (0, padded_cols - B)))
    in_slab = xh.reshape(4, s_total, _LANES)

    out_slab = _policy_call(in_slab, w, b, tile_sublanes)

    out_flat = out_slab.reshape(4, padded_cols)[:, :B]
    new_hidden = out_flat[0:2, :].T       # (B, 2)
    out = out_flat[2:4, :].T              # (B, 2)
    return out, new_hidden


def init_params(key):
    """Fused parameters matching PyTorch shapes.

    i2h: Linear(4, 2), i2o: Linear(4, 2). We store a single fused weight
    W (in=4, out=4) whose columns 0:2 are i2h and 2:4 are i2o (pre-transposed),
    plus a fused bias b (4,) = [bh | bo].
    """
    k1, k2 = jax.random.split(key, 2)
    bound = 1.0 / jnp.sqrt(4.0)          # PyTorch default: 1/sqrt(fan_in)
    w = jax.random.uniform(k1, (4, 4), jnp.float32, -bound, bound)
    b = jax.random.uniform(k2, (4,), jnp.float32, -bound, bound)
    return (w, b)


def reference_forward(x, hidden, params):
    """Pure-JAX reference mirroring the PyTorch module."""
    w, b = params
    combined = jnp.concatenate([x, hidden], axis=1)          # (B, 4)
    new_hidden = combined @ w[:, 0:2] + b[0:2]
    logits = combined @ w[:, 2:4] + b[2:4]
    out = jax.nn.log_softmax(logits, axis=1)
    return out, new_hidden


if __name__ == "__main__":
    key = jax.random.PRNGKey(0)
    kp, kx, ky, kh = jax.random.split(key, 4)

    params = init_params(kp)

    # Small-shape check matching the original usage: batch=2, input dim 2,
    # hidden initialized to zeros (initHidden()).
    B = 2
    x = jax.random.normal(kx, (B, 2), jnp.float32)
    hidden = jnp.zeros((B, 2), jnp.float32)

    out, new_hidden = policy_forward(x, hidden, params)
    out = jax.block_until_ready(out)
    new_hidden = jax.block_until_ready(new_hidden)

    ref_out, ref_hidden = reference_forward(x, hidden, params)
    assert jnp.allclose(out, ref_out, atol=1e-5), "log-softmax output mismatch (B=2)"
    assert jnp.allclose(new_hidden, ref_hidden, atol=1e-5), "hidden mismatch (B=2)"

    # Second check with a non-multiple batch to exercise padding + a >=2-step
    # grid (v7x megacore path) with the dense 3-D tiling.
    B2 = 2500
    x2 = jax.random.normal(ky, (B2, 2), jnp.float32)
    h2 = jax.random.normal(kh, (B2, 2), jnp.float32)

    out2, new_hidden2 = policy_forward(x2, h2, params)
    out2 = jax.block_until_ready(out2)
    new_hidden2 = jax.block_until_ready(new_hidden2)

    ref_out2, ref_hidden2 = reference_forward(x2, h2, params)
    assert jnp.allclose(out2, ref_out2, atol=1e-5), "log-softmax output mismatch (B=2500)"
    assert jnp.allclose(new_hidden2, ref_hidden2, atol=1e-5), "hidden mismatch (B=2500)"

    print("KERNEL_OK")
</pallas_src>

<mosaic_0001>
module attributes {stable_mosaic.version = 11 : i64} {
  func.func @_policy_kernel(%arg0: i32, %arg1: memref<4x4xf32, #tpu.memory_space<smem>>, %arg2: memref<4xf32, #tpu.memory_space<smem>>, %arg3: memref<4x8x128xf32, #tpu.memory_space<vmem>>, %arg4: memref<4x8x128xf32, #tpu.memory_space<vmem>>) attributes {dimension_semantics = [#tpu.dimension_semantics<parallel>], iteration_bounds = array<i64: 1>, scalar_prefetch = 0 : i64, scratch_operands = 0 : i64, tpu.core_type = #tpu.core_type<tc>, window_params = [{transform_indices = @transform_0, window_bounds = array<i64: 4, 4>}, {transform_indices = @transform_1, window_bounds = array<i64: 4>}, {transform_indices = @transform_2, window_bounds = array<i64: 4, 8, 128>}, {transform_indices = @transform_3, window_bounds = array<i64: 4, 8, 128>}]} {
    %c0 = arith.constant 0 : index
    %c0_0 = arith.constant 0 : index
    %c0_1 = arith.constant 0 : index
    %0 = vector.load %arg3[%c0, %c0_0, %c0_1] : memref<4x8x128xf32, #tpu.memory_space<vmem>>, vector<1x8x128xf32>
    %1 = vector.shape_cast %0 : vector<1x8x128xf32> to vector<8x128xf32>
    %c1 = arith.constant 1 : index
    %c0_2 = arith.constant 0 : index
    %c0_3 = arith.constant 0 : index
    %2 = vector.load %arg3[%c1, %c0_2, %c0_3] : memref<4x8x128xf32, #tpu.memory_space<vmem>>, vector<1x8x128xf32>
    %3 = vector.shape_cast %2 : vector<1x8x128xf32> to vector<8x128xf32>
    %c2 = arith.constant 2 : index
    %c0_4 = arith.constant 0 : index
    %c0_5 = arith.constant 0 : index
    %4 = vector.load %arg3[%c2, %c0_4, %c0_5] : memref<4x8x128xf32, #tpu.memory_space<vmem>>, vector<1x8x128xf32>
    %5 = vector.shape_cast %4 : vector<1x8x128xf32> to vector<8x128xf32>
    %c3 = arith.constant 3 : index
    %c0_6 = arith.constant 0 : index
    %c0_7 = arith.constant 0 : index
    %6 = vector.load %arg3[%c3, %c0_6, %c0_7] : memref<4x8x128xf32, #tpu.memory_space<vmem>>, vector<1x8x128xf32>
    %7 = vector.shape_cast %6 : vector<1x8x128xf32> to vector<8x128xf32>
    %c0_8 = arith.constant 0 : index
    %c0_9 = arith.constant 0 : index
    %8 = memref.load %arg1[%c0_8, %c0_9] : memref<4x4xf32, #tpu.memory_space<smem>>
    %c0_10 = arith.constant 0 : index
    %c1_11 = arith.constant 1 : index
    %9 = memref.load %arg1[%c0_10, %c1_11] : memref<4x4xf32, #tpu.memory_space<smem>>
    %c0_12 = arith.constant 0 : index
    %c2_13 = arith.constant 2 : index
    %10 = memref.load %arg1[%c0_12, %c2_13] : memref<4x4xf32, #tpu.memory_space<smem>>
    %c0_14 = arith.constant 0 : index
    %c3_15 = arith.constant 3 : index
    %11 = memref.load %arg1[%c0_14, %c3_15] : memref<4x4xf32, #tpu.memory_space<smem>>
    %c1_16 = arith.constant 1 : index
    %c0_17 = arith.constant 0 : index
    %12 = memref.load %arg1[%c1_16, %c0_17] : memref<4x4xf32, #tpu.memory_space<smem>>
    %c1_18 = arith.constant 1 : index
    %c1_19 = arith.constant 1 : index
    %13 = memref.load %arg1[%c1_18, %c1_19] : memref<4x4xf32, #tpu.memory_space<smem>>
    %c1_20 = arith.constant 1 : index
    %c2_21 = arith.constant 2 : index
    %14 = memref.load %arg1[%c1_20, %c2_21] : memref<4x4xf32, #tpu.memory_space<smem>>
    %c1_22 = arith.constant 1 : index
    %c3_23 = arith.constant 3 : index
    %15 = memref.load %arg1[%c1_22, %c3_23] : memref<4x4xf32, #tpu.memory_space<smem>>
    %c2_24 = arith.constant 2 : index
    %c0_25 = arith.constant 0 : index
    %16 = memref.load %arg1[%c2_24, %c0_25] : memref<4x4xf32, #tpu.memory_space<smem>>
    %c2_26 = arith.constant 2 : index
    %c1_27 = arith.constant 1 : index
    %17 = memref.load %arg1[%c2_26, %c1_27] : memref<4x4xf32, #tpu.memory_space<smem>>
    %c2_28 = arith.constant 2 : index
    %c2_29 = arith.constant 2 : index
    %18 = memref.load %arg1[%c2_28, %c2_29] : memref<4x4xf32, #tpu.memory_space<smem>>
    %c2_30 = arith.constant 2 : index
    %c3_31 = arith.constant 3 : index
    %19 = memref.load %arg1[%c2_30, %c3_31] : memref<4x4xf32, #tpu.memory_space<smem>>
    %c3_32 = arith.constant 3 : index
    %c0_33 = arith.constant 0 : index
    %20 = memref.load %arg1[%c3_32, %c0_33] : memref<4x4xf32, #tpu.memory_space<smem>>
    %c3_34 = arith.constant 3 : index
    %c1_35 = arith.constant 1 : index
    %21 = memref.load %arg1[%c3_34, %c1_35] : memref<4x4xf32, #tpu.memory_space<smem>>
    %c3_36 = arith.constant 3 : index
    %c2_37 = arith.constant 2 : index
    %22 = memref.load %arg1[%c3_36, %c2_37] : memref<4x4xf32, #tpu.memory_space<smem>>
    %c3_38 = arith.constant 3 : index
    %c3_39 = arith.constant 3 : index
    %23 = memref.load %arg1[%c3_38, %c3_39] : memref<4x4xf32, #tpu.memory_space<smem>>
    %c0_40 = arith.constant 0 : index
    %24 = memref.load %arg2[%c0_40] : memref<4xf32, #tpu.memory_space<smem>>
    %c1_41 = arith.constant 1 : index
    %25 = memref.load %arg2[%c1_41] : memref<4xf32, #tpu.memory_space<smem>>
    %c2_42 = arith.constant 2 : index
    %26 = memref.load %arg2[%c2_42] : memref<4xf32, #tpu.memory_space<smem>>
    %c3_43 = arith.constant 3 : index
    %27 = memref.load %arg2[%c3_43] : memref<4xf32, #tpu.memory_space<smem>>
    %28 = vector.broadcast %8 : f32 to vector<8x128xf32>
    %29 = arith.mulf %1, %28 : vector<8x128xf32>
    %30 = vector.broadcast %24 : f32 to vector<8x128xf32>
    %31 = arith.addf %29, %30 : vector<8x128xf32>
    %32 = vector.broadcast %12 : f32 to vector<8x128xf32>
    %33 = arith.mulf %3, %32 : vector<8x128xf32>
    %34 = arith.addf %31, %33 : vector<8x128xf32>
    %35 = vector.broadcast %16 : f32 to vector<8x128xf32>
    %36 = arith.mulf %5, %35 : vector<8x128xf32>
    %37 = arith.addf %34, %36 : vector<8x128xf32>
    %38 = vector.broadcast %20 : f32 to vector<8x128xf32>
    %39 = arith.mulf %7, %38 : vector<8x128xf32>
    %40 = arith.addf %37, %39 : vector<8x128xf32>
    %41 = vector.broadcast %9 : f32 to vector<8x128xf32>
    %42 = arith.mulf %1, %41 : vector<8x128xf32>
    %43 = vector.broadcast %25 : f32 to vector<8x128xf32>
    %44 = arith.addf %42, %43 : vector<8x128xf32>
    %45 = vector.broadcast %13 : f32 to vector<8x128xf32>
    %46 = arith.mulf %3, %45 : vector<8x128xf32>
    %47 = arith.addf %44, %46 : vector<8x128xf32>
    %48 = vector.broadcast %17 : f32 to vector<8x128xf32>
    %49 = arith.mulf %5, %48 : vector<8x128xf32>
    %50 = arith.addf %47, %49 : vector<8x128xf32>
    %51 = vector.broadcast %21 : f32 to vector<8x128xf32>
    %52 = arith.mulf %7, %51 : vector<8x128xf32>
    %53 = arith.addf %50, %52 : vector<8x128xf32>
    %54 = vector.broadcast %10 : f32 to vector<8x128xf32>
    %55 = arith.mulf %1, %54 : vector<8x128xf32>
    %56 = vector.broadcast %26 : f32 to vector<8x128xf32>
    %57 = arith.addf %55, %56 : vector<8x128xf32>
    %58 = vector.broadcast %14 : f32 to vector<8x128xf32>
    %59 = arith.mulf %3, %58 : vector<8x128xf32>
    %60 = arith.addf %57, %59 : vector<8x128xf32>
    %61 = vector.broadcast %18 : f32 to vector<8x128xf32>
    %62 = arith.mulf %5, %61 : vector<8x128xf32>
    %63 = arith.addf %60, %62 : vector<8x128xf32>
    %64 = vector.broadcast %22 : f32 to vector<8x128xf32>
    %65 = arith.mulf %7, %64 : vector<8x128xf32>
    %66 = arith.addf %63, %65 : vector<8x128xf32>
    %67 = vector.broadcast %11 : f32 to vector<8x128xf32>
    %68 = arith.mulf %1, %67 : vector<8x128xf32>
    %69 = vector.broadcast %27 : f32 to vector<8x128xf32>
    %70 = arith.addf %68, %69 : vector<8x128xf32>
    %71 = vector.broadcast %15 : f32 to vector<8x128xf32>
    %72 = arith.mulf %3, %71 : vector<8x128xf32>
    %73 = arith.addf %70, %72 : vector<8x128xf32>
    %74 = vector.broadcast %19 : f32 to vector<8x128xf32>
    %75 = arith.mulf %5, %74 : vector<8x128xf32>
    %76 = arith.addf %73, %75 : vector<8x128xf32>
    %77 = vector.broadcast %23 : f32 to vector<8x128xf32>
    %78 = arith.mulf %7, %77 : vector<8x128xf32>
    %79 = arith.addf %76, %78 : vector<8x128xf32>
    %80 = arith.maximumf %66, %79 : vector<8x128xf32>
    %81 = arith.subf %66, %79 : vector<8x128xf32>
    %82 = math.absf %81 : vector<8x128xf32>
    %cst = arith.constant 0.000000e+00 : f32
    %83 = vector.broadcast %cst : f32 to vector<8x128xf32>
    %84 = arith.subf %83, %82 : vector<8x128xf32>
    %85 = math.exp %84 : vector<8x128xf32>
    %cst_44 = arith.constant 1.000000e+00 : f32
    %86 = vector.broadcast %cst_44 : f32 to vector<8x128xf32>
    %87 = arith.addf %86, %85 : vector<8x128xf32>
    %88 = math.log %87 : vector<8x128xf32>
    %89 = arith.addf %80, %88 : vector<8x128xf32>
    %c0_45 = arith.constant 0 : index
    %c0_46 = arith.constant 0 : index
    %c0_47 = arith.constant 0 : index
    %90 = vector.load %arg4[%c0_45, %c0_46, %c0_47] : memref<4x8x128xf32, #tpu.memory_space<vmem>>, vector<1x8x128xf32>
    %91 = vector.shape_cast %90 : vector<1x8x128xf32> to vector<8x128xf32>
    %92 = vector.shape_cast %40 : vector<8x128xf32> to vector<1x8x128xf32>
    tpu.vector_store %arg4[%c0_45, %c0_46, %c0_47], %92 {strides = array<i32>} : memref<4x8x128xf32, #tpu.memory_space<vmem>>, vector<1x8x128xf32>,
    %c1_48 = arith.constant 1 : index
    %c0_49 = arith.constant 0 : index
    %c0_50 = arith.constant 0 : index
    %93 = vector.load %arg4[%c1_48, %c0_49, %c0_50] : memref<4x8x128xf32, #tpu.memory_space<vmem>>, vector<1x8x128xf32>
    %94 = vector.shape_cast %93 : vector<1x8x128xf32> to vector<8x128xf32>
    %95 = vector.shape_cast %53 : vector<8x128xf32> to vector<1x8x128xf32>
    tpu.vector_store %arg4[%c1_48, %c0_49, %c0_50], %95 {strides = array<i32>} : memref<4x8x128xf32, #tpu.memory_space<vmem>>, vector<1x8x128xf32>,
    %96 = arith.subf %66, %89 : vector<8x128xf32>
    %c2_51 = arith.constant 2 : index
    %c0_52 = arith.constant 0 : index
    %c0_53 = arith.constant 0 : index
    %97 = vector.load %arg4[%c2_51, %c0_52, %c0_53] : memref<4x8x128xf32, #tpu.memory_space<vmem>>, vector<1x8x128xf32>
    %98 = vector.shape_cast %97 : vector<1x8x128xf32> to vector<8x128xf32>
    %99 = vector.shape_cast %96 : vector<8x128xf32> to vector<1x8x128xf32>
    tpu.vector_store %arg4[%c2_51, %c0_52, %c0_53], %99 {strides = array<i32>} : memref<4x8x128xf32, #tpu.memory_space<vmem>>, vector<1x8x128xf32>,
    %100 = arith.subf %79, %89 : vector<8x128xf32>
    %c3_54 = arith.constant 3 : index
    %c0_55 = arith.constant 0 : index
    %c0_56 = arith.constant 0 : index
    %101 = vector.load %arg4[%c3_54, %c0_55, %c0_56] : memref<4x8x128xf32, #tpu.memory_space<vmem>>, vector<1x8x128xf32>
    %102 = vector.shape_cast %101 : vector<1x8x128xf32> to vector<8x128xf32>
    %103 = vector.shape_cast %100 : vector<8x128xf32> to vector<1x8x128xf32>
    tpu.vector_store %arg4[%c3_54, %c0_55, %c0_56], %103 {strides = array<i32>} : memref<4x8x128xf32, #tpu.memory_space<vmem>>, vector<1x8x128xf32>,
    return
  }
  func.func @transform_0(%arg0: i32) -> (i32, i32) {
    %c0_i32 = arith.constant 0 : i32
    %c0_i32_0 = arith.constant 0 : i32
    %c0_i32_1 = arith.constant 0 : i32
    return %c0_i32, %c0_i32_0 : i32, i32
  }
  func.func @transform_1(%arg0: i32) -> i32 {
    %c0_i32 = arith.constant 0 : i32
    %c0_i32_0 = arith.constant 0 : i32
    return %c0_i32 : i32
  }
  func.func @transform_2(%arg0: i32) -> (i32, i32, i32) {
    %c0_i32 = arith.constant 0 : i32
    %c0_i32_0 = arith.constant 0 : i32
    %c0_i32_1 = arith.constant 0 : i32
    return %c0_i32, %arg0, %c0_i32_0 : i32, i32, i32
  }
  func.func @transform_3(%arg0: i32) -> (i32, i32, i32) {
    %c0_i32 = arith.constant 0 : i32
    %c0_i32_0 = arith.constant 0 : i32
    %c0_i32_1 = arith.constant 0 : i32
    return %c0_i32, %arg0, %c0_i32_0 : i32, i32, i32
  }
}

</mosaic_0001>

<llo_original>
// kernel: tpu_custom_call.1
$region0: #{tpu_custom_call.1}
  #allocation0 [shape = 'u32[]', space=smem, size = 0x4, offset = 0x4, fixed_abs, tag = 'smem constant byte address 0x4 - core index']
  #allocation1 [shape = 'u32[144,128]{1,0:T(1,128)}', space=vmem, size = 0x12000, scoped, tag = 'internal scratch']
  %s0 = inlined_call_operand.hbm [shape: f32[4,4], index: 0, kind: input, shape index: {}]
  %s1 = inlined_call_operand.vmem [shape: f32[4], index: 1, kind: input, shape index: {}]
  %s2 = inlined_call_operand.hbm [shape: f32[4,8,128], index: 2, kind: input, shape index: {}]
  %s3 = inlined_call_operand.hbm [shape: f32[4,8,128], index: 3, kind: output, shape index: {}]
  %s4 = sld [smem:[#allocation0]]
  $region34: #{tpu_custom_call.1} parent=0
    _
  %s6 = ssub.s32 1, %s4
  %s7 = scalar_select 0, %s6, %s4
  $region1: #{tpu_custom_call.1} parent=0
    #allocation2 [shape = 'u8[2048]{0}', space=smem, size = 0x800, scoped, tag = 'input window, operand 0, single buffered']
    #allocation3 [shape = 's32[1]{0}', space=sflag, size = 0x4, scoped, tag = 'scoped memory for tpu_custom_call.1']
    #allocation4 [shape = 's32[1]{0}', space=sflag, size = 0x4, scoped, tag = 'scoped memory for tpu_custom_call.1']
    #allocation5 [shape = 's32[1]{0}', space=sflag, size = 0x4, scoped, tag = 'scoped memory for tpu_custom_call.1']
    #allocation6 [shape = 's32[1]{0}', space=sflag, size = 0x4, scoped, tag = 'scoped memory for tpu_custom_call.1']
    #allocation7 [shape = 'u8[512]{0}', space=smem, size = 0x200, scoped, tag = 'input window, operand 1, single buffered']
    #allocation8 [shape = 'u8[16384]{0}', space=vmem, size = 0x4000, scoped, tag = 'input window, operand 2, single buffered']
    #allocation9 [shape = 'u8[16384]{0}', space=vmem, size = 0x4000, scoped, tag = 'output window, operand 0, single buffered']
    %8 = vsyncpa [#allocation5], 0
    %9 = vsyncpa [#allocation6], 0
    %10 = vsyncpa [#allocation3], 0
    %11 = vsyncpa [#allocation4], 0
    // Predicated region
    $region2: #{tpu_custom_call.1} parent=1 // pred_check
      _
    $region3: #{tpu_custom_call.1} parent=1 // pred_check_branch
      %13 = sbr.rel (0) target = $region5
    $region4: #{tpu_custom_call.1} parent=1 // pred_region
      %s15 = ssub.s32 64, 64
      %16 = vsyncadd [#allocation5], %s15
      %19 = dma.hbm_to_smem %s0, 64, [#allocation2], [#allocation5]
    $region5: #{tpu_custom_call.1} parent=1 // pred_fallthru
      _
    // Predicated region
    $region6: #{tpu_custom_call.1} parent=1 // pred_check
      _
    $region7: #{tpu_custom_call.1} parent=1 // pred_check_branch
      %21 = sbr.rel (0) target = $region9
    $region8: #{tpu_custom_call.1} parent=1 // pred_region
      %s23 = ssub.s32 16, 16
      %24 = vsyncadd [#allocation6], %s23
      %s26 = sshll.u32 %s1, 4
      %s27 = int_to_ptr.vmem [resolvable:$true] %s26
      %29 = dma.vmem_to_smem %s27, 16, [#allocation7], [#allocation6]
    $region9: #{tpu_custom_call.1} parent=1 // pred_fallthru
      _
    // Predicated region
    $region10: #{tpu_custom_call.1} parent=1 // pred_check
      _
    $region11: #{tpu_custom_call.1} parent=1 // pred_check_branch
      %31 = sbr.rel (0) target = $region13
    $region12: #{tpu_custom_call.1} parent=1 // pred_region
      %s33 = ssub.s32 512, 512
      %34 = vsyncadd [#allocation3], %s33
      %s35 = sshll.u32 [#allocation8], 4
      %s36 = int_to_ptr.vmem [resolvable:$true] %s35
      %41 = dma.hbm_to_vmem [thread:$0]  %s2, 512, %s36, [#allocation3], 128, 128, 8
    $region13: #{tpu_custom_call.1} parent=1 // pred_fallthru
      _
    // Predicated region
    $region14: #{tpu_custom_call.1} parent=1 // pred_check
      _
    $region15: #{tpu_custom_call.1} parent=1 // pred_check_branch
      %43 = sbr.rel (0) target = $region17
    $region16: #{tpu_custom_call.1} parent=1 // pred_region
      %44 = dma.done [#allocation5], 64
    $region17: #{tpu_custom_call.1} parent=1 // pred_fallthru
      _
    // Predicated region
    $region18: #{tpu_custom_call.1} parent=1 // pred_check
      _
    $region19: #{tpu_custom_call.1} parent=1 // pred_check_branch
      %46 = sbr.rel (0) target = $region21
    $region20: #{tpu_custom_call.1} parent=1 // pred_region
      %47 = dma.done [#allocation6], 16
    $region21: #{tpu_custom_call.1} parent=1 // pred_fallthru
      _
    // Predicated region
    $region22: #{tpu_custom_call.1} parent=1 // pred_check
      _
    $region23: #{tpu_custom_call.1} parent=1 // pred_check_branch
      %49 = sbr.rel (0) target = $region25
    $region24: #{tpu_custom_call.1} parent=1 // pred_region
      %50 = dma.done [#allocation3], 512
    $region25: #{tpu_custom_call.1} parent=1 // pred_fallthru
      _
    %51 = sfence
    %v52 = vld [vmem:[#allocation8] sm:$0xff]
    %s53 = scalar_lea.vmem [#allocation8], 8
    %v54 = vld [vmem:[%s53] sm:$0xff]
    %s55 = scalar_lea.vmem [#allocation8], 16
    %v56 = vld [vmem:[%s55] sm:$0xff]
    %s57 = scalar_lea.vmem [#allocation8], 24
    %v58 = vld [vmem:[%s57] sm:$0xff]
    %s59 = sld [smem:[#allocation2]]
    %s60 = sld [smem:[#allocation2 + $0x1]]
    %s61 = sld [smem:[#allocation2 + $0x2]]
    %s62 = sld [smem:[#allocation2 + $0x3]]
    %s63 = sld [smem:[#allocation2 + $0x80]]
    %s64 = sld [smem:[#allocation2 + $0x81]]
    %s65 = sld [smem:[#allocation2 + $0x82]]
    %s66 = sld [smem:[#allocation2 + $0x83]]
    %s67 = sld [smem:[#allocation2 + $0x100]]
    %s68 = sld [smem:[#allocation2 + $0x101]]
    %s69 = sld [smem:[#allocation2 + $0x102]]
    %s70 = sld [smem:[#allocation2 + $0x103]]
    %s71 = sld [smem:[#allocation2 + $0x180]]
    %s72 = sld [smem:[#allocation2 + $0x181]]
    %s73 = sld [smem:[#allocation2 + $0x182]]
    %s74 = sld [smem:[#allocation2 + $0x183]]
    %s75 = sld [smem:[#allocation7]]
    %s76 = sld [smem:[#allocation7 + $0x1]]
    %s77 = sld [smem:[#allocation7 + $0x2]]
    %s78 = sld [smem:[#allocation7 + $0x3]]
    %v79 = vstv %s59
    %v80 = vmul.f32 %v52, %v79
    %v81 = vstv %s75
    %v82 = vadd.f32 %v80, %v81
    %v83 = vstv %s63
    %v84 = vmul.f32 %v54, %v83
    %v85 = vadd.f32 %v82, %v84
    %v86 = vstv %s67
    %v87 = vmul.f32 %v56, %v86
    %v88 = vadd.f32 %v85, %v87
    %v89 = vstv %s71
    %v90 = vmul.f32 %v58, %v89
    %v91 = vadd.f32 %v88, %v90
    %v92 = vstv %s60
    %v93 = vmul.f32 %v52, %v92
    %v94 = vstv %s76
    %v95 = vadd.f32 %v93, %v94
    %v96 = vstv %s64
    %v97 = vmul.f32 %v54, %v96
    %v98 = vadd.f32 %v95, %v97
    %v99 = vstv %s68
    %v100 = vmul.f32 %v56, %v99
    %v101 = vadd.f32 %v98, %v100
    %v102 = vstv %s72
    %v103 = vmul.f32 %v58, %v102
    %v104 = vadd.f32 %v101, %v103
    %v105 = vstv %s61
    %v106 = vmul.f32 %v52, %v105
    %v107 = vstv %s77
    %v108 = vadd.f32 %v106, %v107
    %v109 = vstv %s65
    %v110 = vmul.f32 %v54, %v109
    %v111 = vadd.f32 %v108, %v110
    %v112 = vstv %s69
    %v113 = vmul.f32 %v56, %v112
    %v114 = vadd.f32 %v111, %v113
    %v115 = vstv %s73
    %v116 = vmul.f32 %v58, %v115
    %v117 = vadd.f32 %v114, %v116
    %v118 = vstv %s62
    %v119 = vmul.f32 %v52, %v118
    %v120 = vstv %s78
    %v121 = vadd.f32 %v119, %v120
    %v122 = vstv %s66
    %v123 = vmul.f32 %v54, %v122
    %v124 = vadd.f32 %v121, %v123
    %v125 = vstv %s70
    %v126 = vmul.f32 %v56, %v125
    %v127 = vadd.f32 %v124, %v126
    %v128 = vstv %s74
    %v129 = vmul.f32 %v58, %v128
    %v130 = vadd.f32 %v127, %v129
    %v131 = vmax.f32 %v117, %v130
    %v132 = vsub.f32 %v117, %v130
    %v133 = vand.u32 2147483647, %v132
    %v134 = vsub.f32 0.0, %v133
    %v135 = vmul.f32 %v134, 1.442695
    %v136 = vpow.pop %v135
    %v137 = vadd.f32 %v136, 1.0
    %v138 = vlog2.pop %v137
    %v139 = vmul.f32 %v138, 0.6931472
    %v140 = vadd.f32 %v131, %v139
    %141 = vst [vmem:[#allocation9] sm:$0xff] %v91
    %s142 = scalar_lea.vmem [#allocation9], 8
    %143 = vst [vmem:[%s142] sm:$0xff] %v104
    %v144 = vsub.f32 %v117, %v140
    %s145 = scalar_lea.vmem [#allocation9], 16
    %146 = vst [vmem:[%s145] sm:$0xff] %v144
    %v147 = vsub.f32 %v130, %v140
    %s148 = scalar_lea.vmem [#allocation9], 24
    %149 = vst [vmem:[%s148] sm:$0xff] %v147
    // Predicated region
    $region26: #{tpu_custom_call.1} parent=1 // pred_check
      _
    $region27: #{tpu_custom_call.1} parent=1 // pred_check_branch
      %151 = sbr.rel (0) target = $region29
    $region28: #{tpu_custom_call.1} parent=1 // pred_region
      %s153 = ssub.s32 512, 512
      %154 = vsyncadd [#allocation4], %s153
      %s155 = sshll.u32 [#allocation9], 4
      %s156 = int_to_ptr.vmem [resolvable:$true] %s155
      %161 = dma.vmem_to_hbm [thread:$0]  %s156, 512, %s3, [#allocation4], 128, 128, 8
    $region29: #{tpu_custom_call.1} parent=1 // pred_fallthru
      _
    // Predicated region
    $region30: #{tpu_custom_call.1} parent=1 // pred_check
      _
    $region31: #{tpu_custom_call.1} parent=1 // pred_check_branch
      %163 = sbr.rel (0) target = $region33
    $region32: #{tpu_custom_call.1} parent=1 // pred_region
      %164 = dma.done [#allocation4], 512
    $region33: #{tpu_custom_call.1} parent=1 // pred_fallthru
      _
    %165 = vsyncpa [#allocation3], 1
    %166 = vsyncpa [#allocation4], 1
    %167 = vsyncpa [#allocation5], 1
    %168 = vsyncpa [#allocation6], 1

</llo_original>
